<compile_context>
chip_gen: v7x
topology: tpu7x:2x2x1
jax: 0.10.0
libtpu: 0.0.40
codegen_flags: <defaults>
</compile_context>

<pallas_src>
import functools

import jax
import jax.numpy as jnp
from jax.experimental import pallas as pl
from jax.experimental.pallas import tpu as pltpu


def _concat_directions_dma_kernel(h_hbm, o_hbm, sem, *, base, num_directions, hidden):
    """Gather the last layer's per-direction hidden states into (B, D*H).

    h_hbm : (rnn_layers*num_directions, B, H) in HBM (untouched except the last layer)
    o_hbm : (B, num_directions*H) in HBM
    sem   : DMA semaphores, one per direction

    Pure HBM->HBM copy: start every per-direction DMA, then wait on all of them.
    (For best strided-DMA efficiency hidden*itemsize should be >= ~512 B; smaller
    rows remain correct, just less bandwidth-efficient — and the op is tiny then.)
    """
    copies = []
    for d in range(num_directions):  # num_directions is a small static Python int
        cp = pltpu.make_async_copy(
            h_hbm.at[base + d],                        # (B, H), contiguous source
            o_hbm.at[:, pl.ds(d * hidden, hidden)],    # (B, H) strided destination window
            sem.at[d],
        )
        cp.start()
        copies.append(cp)
    for cp in copies:
        cp.wait()


def last_time_step(rnn_input, rnn_layers=1, bidirectional=False):
    """Pallas equivalent of LastTimeStep.forward.

    rnn_input: (rnn_output, last_step) where last_step is h_n or (h_n, c_n);
               h_n shape = (rnn_layers*num_directions, B, H). rnn_output is unused.
    """
    num_directions = 2 if bidirectional else 1

    last_step = rnn_input[1]
    if isinstance(last_step, tuple):
        last_step = last_step[0]

    ld, batch, hidden = last_step.shape
    assert ld == rnn_layers * num_directions

    # D == 1: output is a contiguous slice of h_n; no kernel launch needed.
    if num_directions == 1:
        return last_step[rnn_layers - 1]

    base = (rnn_layers - 1) * num_directions
    itemsize = jnp.dtype(last_step.dtype).itemsize
    cost = pl.CostEstimate(
        flops=0,
        transcendentals=0,
        bytes_accessed=2 * num_directions * batch * hidden * itemsize,
    )

    kernel = functools.partial(
        _concat_directions_dma_kernel,
        base=base,
        num_directions=num_directions,
        hidden=hidden,
    )
    return pl.pallas_call(
        kernel,
        out_shape=jax.ShapeDtypeStruct(
            (batch, num_directions * hidden), last_step.dtype
        ),
        in_specs=[pl.BlockSpec(memory_space=pl.ANY)],   # raw HBM ref, no auto-DMA
        out_specs=pl.BlockSpec(memory_space=pl.ANY),    # raw HBM ref, written via DMA
        scratch_shapes=[pltpu.SemaphoreType.DMA((num_directions,))],
        cost_estimate=cost,
    )(last_step)


def _reference(h_n, rnn_layers, num_directions):
    L, D = rnn_layers, num_directions
    _, B, H = h_n.shape
    return h_n.reshape(L, D, B, H)[L - 1].transpose(1, 0, 2).reshape(B, D * H)


if __name__ == "__main__":
    key = jax.random.PRNGKey(0)
    k1, k2, k3, k4, k5, k6 = jax.random.split(key, 6)

    # Case 1: bidirectional LSTM-style ((h_n, c_n)), 2 layers, hidden multiple of 128.
    L, D, B, H, S = 2, 2, 2, 128, 8
    rnn_output = jax.random.normal(k1, (B, S, D * H), dtype=jnp.float32)  # unused
    h_n = jax.random.normal(k2, (L * D, B, H), dtype=jnp.float32)
    c_n = jax.random.normal(k3, (L * D, B, H), dtype=jnp.float32)
    got = jax.block_until_ready(
        last_time_step((rnn_output, (h_n, c_n)), rnn_layers=L, bidirectional=True)
    )
    ref = _reference(h_n, L, D)
    assert got.shape == (B, D * H)
    assert jnp.array_equal(got, ref), "bidirectional H=128 mismatch vs reference"

    # Case 2: bidirectional GRU-style (h_n only), hidden NOT a multiple of 128.
    L2, D2, B2, H2 = 2, 2, 2, 32
    h_n2 = jax.random.normal(k4, (L2 * D2, B2, H2), dtype=jnp.float32)
    got2 = jax.block_until_ready(
        last_time_step((rnn_output, h_n2), rnn_layers=L2, bidirectional=True)
    )
    ref2 = _reference(h_n2, L2, D2)
    assert got2.shape == (B2, D2 * H2)
    assert jnp.array_equal(got2, ref2), "bidirectional H=32 mismatch vs reference"

    # Case 3: bidirectional, bf16, single layer.
    L3, D3, B3, H3 = 1, 2, 4, 256
    h_n3 = jax.random.normal(k5, (L3 * D3, B3, H3), dtype=jnp.bfloat16)
    got3 = jax.block_until_ready(
        last_time_step((rnn_output, (h_n3, h_n3)), rnn_layers=L3, bidirectional=True)
    )
    ref3 = _reference(h_n3, L3, D3)
    assert got3.shape == (B3, D3 * H3)
    assert jnp.array_equal(got3, ref3), "bidirectional bf16 mismatch vs reference"

    # Case 4: unidirectional -> wrapper shortcut (plain slice, no Pallas launch).
    L4, B4, H4 = 2, 2, 32
    h_n4 = jax.random.normal(k6, (L4, B4, H4), dtype=jnp.float32)
    got4 = jax.block_until_ready(
        last_time_step((rnn_output, (h_n4, h_n4)), rnn_layers=L4, bidirectional=False)
    )
    assert got4.shape == (B4, H4)
    assert jnp.array_equal(got4, h_n4[L4 - 1]), "unidirectional shortcut mismatch"

    print("KERNEL_OK")
</pallas_src>

<mosaic_0001>
module attributes {stable_mosaic.version = 11 : i64} {
  func.func @_concat_directions_dma_kernel(%arg0: memref<4x2x128xf32, #tpu.memory_space<any>>, %arg1: memref<2x256xf32, #tpu.memory_space<any>>, %arg2: memref<2x!tpu.dma_semaphore, #tpu.memory_space<semaphore_mem>>) attributes {dimension_semantics = [], scalar_prefetch = 0 : i64, scratch_operands = 1 : i64, tpu.core_type = #tpu.core_type<tc>} {
    %c2_i32 = arith.constant 2 : i32
    %c0_i32 = arith.constant 0 : i32
    %c0_i32_0 = arith.constant 0 : i32
    %c0_i32_1 = arith.constant 0 : i32
    %0 = tpu.memref_slice %arg0[%c2_i32, %c0_i32_0, %c0_i32_1] : memref<4x2x128xf32, #tpu.memory_space<any>> -> memref<1x2x128xf32, #tpu.memory_space<any>>
    %1 = tpu.memref_squeeze %0 : memref<1x2x128xf32, #tpu.memory_space<any>> -> memref<2x128xf32, #tpu.memory_space<any>>
    %c0_i32_2 = arith.constant 0 : i32
    %c0_i32_3 = arith.constant 0 : i32
    %2 = tpu.memref_slice %arg1[%c0_i32_2, %c0_i32_3] : memref<2x256xf32, #tpu.memory_space<any>> -> memref<2x128xf32, #tpu.memory_space<any>>
    %3 = tpu.memref_slice %arg2[%c0_i32] : memref<2x!tpu.dma_semaphore, #tpu.memory_space<semaphore_mem>> -> memref<1x!tpu.dma_semaphore, #tpu.memory_space<semaphore_mem>>
    %4 = tpu.memref_squeeze %3 : memref<1x!tpu.dma_semaphore, #tpu.memory_space<semaphore_mem>> -> memref<!tpu.dma_semaphore, #tpu.memory_space<semaphore_mem>>
    tpu.enqueue_dma source(%1 : memref<2x128xf32, #tpu.memory_space<any>>) target(%2 : memref<2x128xf32, #tpu.memory_space<any>>) target_semaphore(%4 : memref<!tpu.dma_semaphore, #tpu.memory_space<semaphore_mem>>)
    %c3_i32 = arith.constant 3 : i32
    %c1_i32 = arith.constant 1 : i32
    %c0_i32_4 = arith.constant 0 : i32
    %c0_i32_5 = arith.constant 0 : i32
    %5 = tpu.memref_slice %arg0[%c3_i32, %c0_i32_4, %c0_i32_5] : memref<4x2x128xf32, #tpu.memory_space<any>> -> memref<1x2x128xf32, #tpu.memory_space<any>>
    %6 = tpu.memref_squeeze %5 : memref<1x2x128xf32, #tpu.memory_space<any>> -> memref<2x128xf32, #tpu.memory_space<any>>
    %c0_i32_6 = arith.constant 0 : i32
    %c128_i32 = arith.constant 128 : i32
    %7 = tpu.memref_slice %arg1[%c0_i32_6, %c128_i32] : memref<2x256xf32, #tpu.memory_space<any>> -> memref<2x128xf32, #tpu.memory_space<any>>
    %8 = tpu.memref_slice %arg2[%c1_i32] : memref<2x!tpu.dma_semaphore, #tpu.memory_space<semaphore_mem>> -> memref<1x!tpu.dma_semaphore, #tpu.memory_space<semaphore_mem>>
    %9 = tpu.memref_squeeze %8 : memref<1x!tpu.dma_semaphore, #tpu.memory_space<semaphore_mem>> -> memref<!tpu.dma_semaphore, #tpu.memory_space<semaphore_mem>>
    tpu.enqueue_dma source(%6 : memref<2x128xf32, #tpu.memory_space<any>>) target(%7 : memref<2x128xf32, #tpu.memory_space<any>>) target_semaphore(%9 : memref<!tpu.dma_semaphore, #tpu.memory_space<semaphore_mem>>)
    %c2_i32_7 = arith.constant 2 : i32
    %c0_i32_8 = arith.constant 0 : i32
    %c0_i32_9 = arith.constant 0 : i32
    %c0_i32_10 = arith.constant 0 : i32
    %10 = tpu.memref_slice %arg0[%c2_i32_7, %c0_i32_9, %c0_i32_10] : memref<4x2x128xf32, #tpu.memory_space<any>> -> memref<1x2x128xf32, #tpu.memory_space<any>>
    %11 = tpu.memref_squeeze %10 : memref<1x2x128xf32, #tpu.memory_space<any>> -> memref<2x128xf32, #tpu.memory_space<any>>
    %c0_i32_11 = arith.constant 0 : i32
    %c0_i32_12 = arith.constant 0 : i32
    %12 = tpu.memref_slice %arg1[%c0_i32_11, %c0_i32_12] : memref<2x256xf32, #tpu.memory_space<any>> -> memref<2x128xf32, #tpu.memory_space<any>>
    %13 = tpu.memref_slice %arg2[%c0_i32_8] : memref<2x!tpu.dma_semaphore, #tpu.memory_space<semaphore_mem>> -> memref<1x!tpu.dma_semaphore, #tpu.memory_space<semaphore_mem>>
    %14 = tpu.memref_squeeze %13 : memref<1x!tpu.dma_semaphore, #tpu.memory_space<semaphore_mem>> -> memref<!tpu.dma_semaphore, #tpu.memory_space<semaphore_mem>>
    tpu.wait_dma2 semaphore(%14 : memref<!tpu.dma_semaphore, #tpu.memory_space<semaphore_mem>>) src(%11 : memref<2x128xf32, #tpu.memory_space<any>>) dst(%12 : memref<2x128xf32, #tpu.memory_space<any>>)
    %c3_i32_13 = arith.constant 3 : i32
    %c1_i32_14 = arith.constant 1 : i32
    %c0_i32_15 = arith.constant 0 : i32
    %c0_i32_16 = arith.constant 0 : i32
    %15 = tpu.memref_slice %arg0[%c3_i32_13, %c0_i32_15, %c0_i32_16] : memref<4x2x128xf32, #tpu.memory_space<any>> -> memref<1x2x128xf32, #tpu.memory_space<any>>
    %16 = tpu.memref_squeeze %15 : memref<1x2x128xf32, #tpu.memory_space<any>> -> memref<2x128xf32, #tpu.memory_space<any>>
    %c0_i32_17 = arith.constant 0 : i32
    %c128_i32_18 = arith.constant 128 : i32
    %17 = tpu.memref_slice %arg1[%c0_i32_17, %c128_i32_18] : memref<2x256xf32, #tpu.memory_space<any>> -> memref<2x128xf32, #tpu.memory_space<any>>
    %18 = tpu.memref_slice %arg2[%c1_i32_14] : memref<2x!tpu.dma_semaphore, #tpu.memory_space<semaphore_mem>> -> memref<1x!tpu.dma_semaphore, #tpu.memory_space<semaphore_mem>>
    %19 = tpu.memref_squeeze %18 : memref<1x!tpu.dma_semaphore, #tpu.memory_space<semaphore_mem>> -> memref<!tpu.dma_semaphore, #tpu.memory_space<semaphore_mem>>
    tpu.wait_dma2 semaphore(%19 : memref<!tpu.dma_semaphore, #tpu.memory_space<semaphore_mem>>) src(%16 : memref<2x128xf32, #tpu.memory_space<any>>) dst(%17 : memref<2x128xf32, #tpu.memory_space<any>>)
    return
  }
}

</mosaic_0001>

<llo_original>
// kernel: tpu_custom_call.1
$region0: #{tpu_custom_call.1}
  #allocation0 [shape = 'u32[]', space=smem, size = 0x4, offset = 0x4, fixed_abs, tag = 'smem constant byte address 0x4 - core index']
  #allocation1 [shape = 'u32[144,128]{1,0:T(1,128)}', space=vmem, size = 0x12000, scoped, tag = 'internal scratch']
  #allocation2 [shape = 's32[2]{0}', space=sflag, size = 0x8, scoped, tag = 'scratch operand']
  #allocation3 [shape = 's32[]', space=sflag, size = 0x4, offset = 0, fixed_abs, tag = 'sflag constant byte address 0x0 - dummy sync flag']
  #allocation4 [shape = 'u32[0]{0}', space=smem, size = 0, offset = 0, fixed_abs, tag = 'smem constant byte address 0x0 - null']
  #allocation5 [shape = 's32[]', space=sflag, size = 0x4, offset = 0, fixed_abs, tag = 'sflag constant byte address 0x0 - dummy sync flag']
  #allocation6 [shape = 'u32[0]{0}', space=smem, size = 0, offset = 0, fixed_abs, tag = 'smem constant byte address 0x0 - null']
  %s0 = inlined_call_operand.hbm [shape: f32[4,2,128], index: 0, kind: input, shape index: {}]
  %s1 = inlined_call_operand.hbm [shape: f32[2,256], index: 1, kind: output, shape index: {}]
  %s2 = sld [smem:[#allocation0]]
  $region2: #{tpu_custom_call.1} parent=0
    _
  %s4 = ssub.s32 1, %s2
  %s5 = scalar_select 0, %s4, %s2
  %s6 = scalar_lea.hbm %s0, 64
  %s8 = sshll.u32 1, 14
  %s9 = sxor.u32 4294967295, %s8
  %s12 = sshll.u32 3, 24
  %s13 = sxor.u32 4294967295, %s12
  %s14 = sand.u32 0, %s13
  %s16 = sor.u32 %s14, 0
  %19 = dma.general %s6, 32, %s1, [#allocation2], [#allocation3], [#allocation4], %s16, 0
  %s20 = scalar_lea.hbm %s0, 96
  %s21 = scalar_lea.hbm %s1, 32
  %s22 = scalar_lea.sflag [#allocation2], 1
  %s24 = sshll.u32 1, 14
  %s25 = sxor.u32 4294967295, %s24
  %s28 = sshll.u32 3, 24
  %s29 = sxor.u32 4294967295, %s28
  %s30 = sand.u32 0, %s29
  %s32 = sor.u32 %s30, 0
  %35 = dma.general %s20, 32, %s21, %s22, [#allocation5], [#allocation6], %s32, 0
  %s36 = smul.u32 2, 1
  %s37 = smul.u32 %s36, 1
  %s38 = sshll.u32 %s37, 4
  %39 = dma.done [#allocation2], %s38
  %s40 = sshll.u32 %s37, 4
  %41 = dma.done %s22, %s40
  %42 = vsyncmov [#allocation2]
  %s43 = vpop.sfrf %42
  %p44 = scmp.eq.s32.totalorder %s43, 0
  %p45 = pneg %p44
  %47 = shalt.err (%p45)
  %s48 = scalar_lea.sflag [#allocation2], 1
  %49 = vsyncmov %s48
  %s50 = vpop.sfrf %49
  %p51 = scmp.eq.s32.totalorder %s50, 0
  %p52 = pneg %p51
  %54 = shalt.err (%p52)

</llo_original>
